<compile_context>
chip_gen: v6e
topology: v6e:2x2x1
jax: 0.10.0
libtpu: 0.0.40
codegen_flags: <defaults>
</compile_context>

<pallas_src>
import functools

import jax
import jax.numpy as jnp
import numpy as np
from jax import lax
from jax.experimental import pallas as pl
from jax.experimental.pallas import tpu as pltpu


# ---------------------------------------------------------------------------
# Fused Pallas kernel: axial-2x upsample + concat + 3x3 conv + BN + ReLU6
# ---------------------------------------------------------------------------
def _conv_ax_upsampler_kernel(x0_ref, x_ref, w_ref, b_ref, o_ref,
                              xcat_scr, p_scr, *, width, lo, hi, frac):
    """b_blk images per grid step.

    x0_ref:   (b_blk, cat_c, L)      skip connection, flat spatial (L = H_out*W)
    x_ref:    (b_blk, in_c, L_in)    low-res input, flat spatial (L_in = H_in*W)
    w_ref:    (C_out, 9*C_tot)       conv weight, BN scale folded, tap-major
    b_ref:    (C_out, 1)             folded BN shift (f32)
    o_ref:    (b_blk, C_out, L)      output (NCHW with spatial flattened)
    xcat_scr: (C_tot, L)             concatenated channel slab (f32)
    p_scr:    (9*C_tot, L)           im2col operand (compute dtype)
    lo/hi/frac: static per-output-row blend taps for the axial 2x upsample
    """
    b_blk, cat_c, l = x0_ref.shape
    in_c = x_ref.shape[1]
    ctot = cat_c + in_c
    h_in = x_ref.shape[2] // width
    h_out = len(lo)

    # Border-validity predicates, built ONCE and reused for every tap and
    # every image in the block (one (1, L) vreg each).
    lane = lax.broadcasted_iota(jnp.int32, (1, l), 1)
    colw = lane % width
    col_ok = (colw >= 1, None, colw <= width - 2)      # dw = -1, 0, +1
    row_ok = (lane >= width, None, lane < l - width)   # dh = -1, 0, +1
    tap_mask = [[None] * 3 for _ in range(3)]
    for kh in range(3):
        for kw in range(3):
            rm, cm = row_ok[kh], col_ok[kw]
            tap_mask[kh][kw] = rm if cm is None else (cm if rm is None
                                                      else rm & cm)

    for b in range(b_blk):
        # 1) skip connection -> rows [0, cat_c) of the concat slab
        #    (lane-dense store).
        xcat_scr[0:cat_c, :] = x0_ref[b]

        # 2) axial 2x bilinear upsample (align_corners=True) as a static
        #    2-tap VPU row blend -- no (L_in, L_out) kron matrix, no MXU.
        rows = [x_ref[b, :, h * width:(h + 1) * width] for h in range(h_in)]
        for ho in range(h_out):
            f = frac[ho]
            if f == 0.0:
                up = rows[lo[ho]]
            else:
                up = (1.0 - f) * rows[lo[ho]] + f * rows[hi[ho]]
            xcat_scr[cat_c:ctot, ho * width:(ho + 1) * width] = up

        xcat = xcat_scr[...]

        # 3) im2col: per tap, one XLU lane roll of the whole slab, one select
        #    against the reused border mask, one full-width unmasked store.
        #    Rolled-in wrap values are exactly the masked (padding) positions,
        #    so no zero-init of p_scr is needed.
        for kh in range(3):
            for kw in range(3):
                s = (kh - 1) * width + (kw - 1)   # flat source offset
                tap = xcat if s == 0 else pltpu.roll(xcat, shift=(-s) % l,
                                                     axis=1)
                m = tap_mask[kh][kw]
                if m is not None:
                    tap = jnp.where(m, tap, 0.0)
                r0 = (kh * 3 + kw) * ctot
                p_scr[r0:r0 + ctot, :] = tap.astype(p_scr.dtype)

        # 4) whole 3x3 conv as ONE lane-dense MXU matmul:
        #    (C_out, 9*C_tot) @ (9*C_tot, L), f32 accumulation.
        acc = jnp.dot(w_ref[...], p_scr[...],
                      preferred_element_type=jnp.float32)

        # 5) BatchNorm shift (scale pre-folded into w) + ReLU6; NCHW-flat
        #    lane-dense store.
        o_ref[b] = jnp.clip(acc + b_ref[...], 0.0, 6.0).astype(o_ref.dtype)


# ---------------------------------------------------------------------------
# Wrapper
# ---------------------------------------------------------------------------
def _axial_blend_taps(h_in, h_out):
    """Static (lo, hi, frac) for 2x bilinear upsample along H, align_corners."""
    if h_in == 1:
        return (0,) * h_out, (0,) * h_out, (0.0,) * h_out
    pos = np.arange(h_out) * (h_in - 1) / (h_out - 1)
    lo = np.floor(pos).astype(np.int64)
    hi = np.minimum(lo + 1, h_in - 1)
    frac = pos - lo
    return (tuple(int(v) for v in lo), tuple(int(v) for v in hi),
            tuple(float(v) for v in frac))


def conv_ax_upsampler(params, x0, x, *, eps=1e-5,
                      compute_dtype=jnp.float32, b_blk=1):
    """Fused Pallas forward of ConvAxUpsampler; x0, x are NCHW float32.

    compute_dtype: dtype of the conv weight + im2col operand (f32 or bf16;
                   accumulation is always f32).
    b_blk:         images per grid step.  Keep n // b_blk even on v7x so both
                   TensorCores get work; b_blk > 1 amortizes per-step overhead
                   on single-TC v5e/v6e.
    """
    # TODO(synk): BatchNorm2d is applied in eval mode (running stats folded
    # into scale/shift); training-mode batch statistics not implemented.
    # TODO(synk): output kept f32; emit bf16 if the consumer tolerates it to
    # halve the dominant HBM write traffic.
    # TODO(synk): constant operands (w_ref, b_ref) are still double-buffered
    # by the pipeline; for production-sized weights single-buffer them
    # (pipeline_mode=pl.Buffered(1)) or DMA them once into persistent scratch.
    # TODO(synk): for production-sized H/W/C, tile H (2-row halo) and L so the
    # (1+9)*C_tot*L_tile scratch plus double-buffered blocks stay inside
    # v7x's 64 MiB VMEM.
    n, cat_c, h_out, width = x0.shape
    nb, in_c, h_in, wb = x.shape
    assert nb == n and wb == width and h_out == 2 * h_in
    assert n % b_blk == 0
    c_out = params["w"].shape[0]
    ctot = cat_c + in_c
    l_in = h_in * width
    l_out = h_out * width

    # Fold BN scale into the conv weight; OIHW -> (C_out, 9*C_tot), tap-major
    # channel-minor to match the in-kernel im2col row order.
    scale = params["gamma"] / jnp.sqrt(params["var"] + eps)
    shift = (params["beta"] - params["mean"] * scale).reshape(c_out, 1)
    w_mat = (jnp.transpose(params["w"], (0, 2, 3, 1)).reshape(c_out, 9 * ctot)
             * scale[:, None]).astype(compute_dtype)
    shift = shift.astype(jnp.float32)

    lo, hi, frac = _axial_blend_taps(h_in, h_out)

    x0f = x0.reshape(n, cat_c, l_out).astype(jnp.float32)   # free reshape
    xf = x.reshape(n, in_c, l_in).astype(jnp.float32)       # free reshape

    flops = 2 * n * c_out * 9 * ctot * l_out + 3 * n * in_c * l_out
    itemsize = jnp.dtype(compute_dtype).itemsize
    bytes_accessed = (4 * (n * cat_c * l_out + n * in_c * l_in + c_out
                           + n * c_out * l_out)
                      + itemsize * c_out * 9 * ctot)

    kernel = functools.partial(_conv_ax_upsampler_kernel, width=width,
                               lo=lo, hi=hi, frac=frac)

    out_flat = pl.pallas_call(
        kernel,
        out_shape=jax.ShapeDtypeStruct((n, c_out, l_out), jnp.float32),
        grid_spec=pltpu.PrefetchScalarGridSpec(
            num_scalar_prefetch=0,
            grid=(n // b_blk,),     # 'parallel' -> shards across v7x's 2 TCs
            in_specs=[
                pl.BlockSpec((b_blk, cat_c, l_out), lambda i: (i, 0, 0)),
                pl.BlockSpec((b_blk, in_c, l_in), lambda i: (i, 0, 0)),
                pl.BlockSpec((c_out, 9 * ctot), lambda i: (0, 0)),
                pl.BlockSpec((c_out, 1), lambda i: (0, 0)),
            ],
            out_specs=pl.BlockSpec((b_blk, c_out, l_out), lambda i: (i, 0, 0)),
            scratch_shapes=[
                pltpu.VMEM((ctot, l_out), jnp.float32),      # concat slab
                pltpu.VMEM((9 * ctot, l_out), compute_dtype),  # im2col operand
            ],
        ),
        compiler_params=pltpu.CompilerParams(
            dimension_semantics=("parallel",),
            vmem_limit_bytes=32 * 1024 * 1024),
        cost_estimate=pl.CostEstimate(
            flops=flops, transcendentals=0, bytes_accessed=bytes_accessed),
    )(x0f, xf, w_mat, shift)

    return out_flat.reshape(n, c_out, h_out, width)           # free reshape


# ---------------------------------------------------------------------------
# Pure-JAX reference (correctness check only)
# ---------------------------------------------------------------------------
def upsample_h_x2_bilinear_align_corners(x_nchw):
    n, c, h, w = x_nchw.shape
    ho = 2 * h
    if h == 1:
        return jnp.repeat(x_nchw, 2, axis=2)
    pos = jnp.arange(ho, dtype=jnp.float32) * (h - 1) / (ho - 1)
    lo = jnp.floor(pos).astype(jnp.int32)
    hi = jnp.minimum(lo + 1, h - 1)
    frac = (pos - lo.astype(jnp.float32)).astype(x_nchw.dtype)
    xl = x_nchw[:, :, lo, :]
    xh = x_nchw[:, :, hi, :]
    return (xl * (1.0 - frac)[None, None, :, None]
            + xh * frac[None, None, :, None])


def reference(params, x0, x, eps=1e-5):
    xu = upsample_h_x2_bilinear_align_corners(x)
    xc = jnp.concatenate([x0, xu], axis=1)
    y = lax.conv_general_dilated(
        xc, params["w"], window_strides=(1, 1), padding=((1, 1), (1, 1)),
        dimension_numbers=("NCHW", "OIHW", "NCHW"))
    scale = params["gamma"] / jnp.sqrt(params["var"] + eps)
    shift = params["beta"] - params["mean"] * scale
    y = y * scale[None, :, None, None] + shift[None, :, None, None]
    return jnp.clip(y, 0.0, 6.0)


def init_params(key, cat_c, in_c, out_c):
    tot = cat_c + in_c
    k1, k2, k3, k4, k5 = jax.random.split(key, 5)
    w = jax.random.normal(k1, (out_c, tot, 3, 3), jnp.float32) / np.sqrt(tot * 9)
    gamma = 1.0 + 0.1 * jax.random.normal(k2, (out_c,), jnp.float32)
    beta = 0.1 * jax.random.normal(k3, (out_c,), jnp.float32)
    mean = 0.05 * jax.random.normal(k4, (out_c,), jnp.float32)
    var = 1.0 + 0.1 * jnp.abs(jax.random.normal(k5, (out_c,), jnp.float32))
    return {"w": w, "gamma": gamma, "beta": beta, "mean": mean, "var": var}


if __name__ == "__main__":
    key = jax.random.PRNGKey(0)
    kp, k0, kx = jax.random.split(key, 3)

    # Small shapes consistent with the module.
    n, cat_c, in_c, out_c = 2, 4, 4, 8
    h_in, width = 8, 16                  # x: (2, 4, 8, 16) -> upsampled H = 16
    params = init_params(kp, cat_c, in_c, out_c)
    x0 = jax.random.normal(k0, (n, cat_c, 2 * h_in, width), jnp.float32)
    x = jax.random.normal(kx, (n, in_c, h_in, width), jnp.float32)

    ref = jax.block_until_ready(reference(params, x0, x))

    # f32 path, one image per step (grid length even -> both v7x TCs busy).
    fwd_f32 = jax.jit(functools.partial(conv_ax_upsampler,
                                        compute_dtype=jnp.float32, b_blk=1))
    out = jax.block_until_ready(fwd_f32(params, x0, x))
    np.testing.assert_allclose(np.asarray(out), np.asarray(ref),
                               rtol=1e-4, atol=1e-4)
    assert out.shape == (n, out_c, 2 * h_in, width)

    # f32 path with 2 images per grid step (amortizes per-step overhead on
    # single-TC v5e/v6e).
    fwd_blk = jax.jit(functools.partial(conv_ax_upsampler,
                                        compute_dtype=jnp.float32, b_blk=2))
    out_blk = jax.block_until_ready(fwd_blk(params, x0, x))
    np.testing.assert_allclose(np.asarray(out_blk), np.asarray(ref),
                               rtol=1e-4, atol=1e-4)

    # bf16 conv operands (f32 accumulation) for v6e/v7x MXU throughput;
    # looser tolerance for the bf16 rounding.
    fwd_bf16 = jax.jit(functools.partial(conv_ax_upsampler,
                                         compute_dtype=jnp.bfloat16, b_blk=1))
    out_bf16 = jax.block_until_ready(fwd_bf16(params, x0, x))
    np.testing.assert_allclose(np.asarray(out_bf16), np.asarray(ref),
                               rtol=5e-2, atol=5e-2)

    print("KERNEL_OK")
</pallas_src>

<mosaic_0001>
module attributes {stable_mosaic.version = 11 : i64} {
  func.func @_conv_ax_upsampler_kernel(%arg0: i32, %arg1: memref<1x4x256xf32, #tpu.memory_space<vmem>>, %arg2: memref<1x4x128xf32, #tpu.memory_space<vmem>>, %arg3: memref<8x72xf32, #tpu.memory_space<vmem>>, %arg4: memref<8x1xf32, #tpu.memory_space<vmem>>, %arg5: memref<1x8x256xf32, #tpu.memory_space<vmem>>, %arg6: memref<8x256xf32, #tpu.memory_space<vmem>>, %arg7: memref<72x256xf32, #tpu.memory_space<vmem>>) attributes {dimension_semantics = [#tpu.dimension_semantics<parallel>], iteration_bounds = array<i64: 2>, scalar_prefetch = 0 : i64, scratch_operands = 2 : i64, tpu.core_type = #tpu.core_type<tc>, window_params = [{transform_indices = @transform_0, window_bounds = array<i64: 1, 4, 256>}, {transform_indices = @transform_1, window_bounds = array<i64: 1, 4, 128>}, {pipeline_mode = #tpu.pipeline_mode<synchronous>, transform_indices = @transform_2, window_bounds = array<i64: 8, 72>}, {pipeline_mode = #tpu.pipeline_mode<synchronous>, transform_indices = @transform_3, window_bounds = array<i64: 8, 1>}, {transform_indices = @transform_4, window_bounds = array<i64: 1, 8, 256>}]} {
    %0 = tpu.iota {dimensions = array<i32: 1>} : vector<1x256xi32>
    %c16_i32 = arith.constant 16 : i32
    %c0_i32 = arith.constant 0 : i32
    %1 = arith.cmpi eq, %c16_i32, %c0_i32 : i32
    %c1_i32 = arith.constant 1 : i32
    %2 = arith.select %1, %c1_i32, %c16_i32 : i32
    %3 = vector.broadcast %2 : i32 to vector<1x256xi32>
    %4 = arith.remsi %0, %3 : vector<1x256xi32>
    %c0_i32_0 = arith.constant 0 : i32
    %5 = vector.broadcast %c0_i32_0 : i32 to vector<1x256xi32>
    %6 = arith.cmpi ne, %4, %5 : vector<1x256xi32>
    %c0_i32_1 = arith.constant 0 : i32
    %7 = vector.broadcast %c0_i32_1 : i32 to vector<1x256xi32>
    %8 = arith.cmpi slt, %4, %7 : vector<1x256xi32>
    %c0_i32_2 = arith.constant 0 : i32
    %9 = arith.cmpi slt, %2, %c0_i32_2 : i32
    %10 = vector.broadcast %9 : i1 to vector<1x256xi1>
    %11 = vector.broadcast %10 : vector<1x256xi1> to vector<1x256xi1>
    %12 = arith.xori %8, %11 : vector<1x256xi1>
    %13 = arith.andi %12, %6 : vector<1x256xi1>
    %14 = vector.broadcast %2 : i32 to vector<1x256xi32>
    %15 = arith.addi %4, %14 : vector<1x256xi32>
    %16 = arith.select %13, %15, %4 : vector<1x256xi1>, vector<1x256xi32>
    %c1_i32_3 = arith.constant 1 : i32
    %17 = vector.broadcast %c1_i32_3 : i32 to vector<1x256xi32>
    %18 = arith.cmpi sge, %16, %17 : vector<1x256xi32>
    %c14_i32 = arith.constant 14 : i32
    %19 = vector.broadcast %c14_i32 : i32 to vector<1x256xi32>
    %20 = arith.cmpi sle, %16, %19 : vector<1x256xi32>
    %c16_i32_4 = arith.constant 16 : i32
    %21 = vector.broadcast %c16_i32_4 : i32 to vector<1x256xi32>
    %22 = arith.cmpi sge, %0, %21 : vector<1x256xi32>
    %c240_i32 = arith.constant 240 : i32
    %23 = vector.broadcast %c240_i32 : i32 to vector<1x256xi32>
    %24 = arith.cmpi slt, %0, %23 : vector<1x256xi32>
    %25 = arith.andi %22, %18 : vector<1x256xi1>
    %26 = arith.andi %22, %20 : vector<1x256xi1>
    %27 = arith.andi %24, %18 : vector<1x256xi1>
    %28 = arith.andi %24, %20 : vector<1x256xi1>
    %c0 = arith.constant 0 : index
    %c0_5 = arith.constant 0 : index
    %c0_6 = arith.constant 0 : index
    %29 = vector.load %arg1[%c0, %c0_5, %c0_6] : memref<1x4x256xf32, #tpu.memory_space<vmem>>, vector<1x4x256xf32>
    %30 = vector.shape_cast %29 : vector<1x4x256xf32> to vector<4x256xf32>
    %c0_7 = arith.constant 0 : index
    %c0_8 = arith.constant 0 : index
    %31 = vector.load %arg6[%c0_7, %c0_8] : memref<8x256xf32, #tpu.memory_space<vmem>>, vector<4x256xf32>
    tpu.vector_store %arg6[%c0_7, %c0_8], %30 {strides = array<i32>} : memref<8x256xf32, #tpu.memory_space<vmem>>, vector<4x256xf32>,
    %c0_9 = arith.constant 0 : index
    %c0_10 = arith.constant 0 : index
    %c0_11 = arith.constant 0 : index
    %32 = vector.load %arg2[%c0_9, %c0_10, %c0_11] : memref<1x4x128xf32, #tpu.memory_space<vmem>>, vector<1x4x16xf32>
    %33 = vector.shape_cast %32 : vector<1x4x16xf32> to vector<4x16xf32>
    %c0_12 = arith.constant 0 : index
    %c0_13 = arith.constant 0 : index
    %c16 = arith.constant 16 : index
    %34 = vector.load %arg2[%c0_12, %c0_13, %c16] : memref<1x4x128xf32, #tpu.memory_space<vmem>>, vector<1x4x16xf32>
    %35 = vector.shape_cast %34 : vector<1x4x16xf32> to vector<4x16xf32>
    %c0_14 = arith.constant 0 : index
    %c0_15 = arith.constant 0 : index
    %c32 = arith.constant 32 : index
    %36 = vector.load %arg2[%c0_14, %c0_15, %c32] : memref<1x4x128xf32, #tpu.memory_space<vmem>>, vector<1x4x16xf32>
    %37 = vector.shape_cast %36 : vector<1x4x16xf32> to vector<4x16xf32>
    %c0_16 = arith.constant 0 : index
    %c0_17 = arith.constant 0 : index
    %c48 = arith.constant 48 : index
    %38 = vector.load %arg2[%c0_16, %c0_17, %c48] : memref<1x4x128xf32, #tpu.memory_space<vmem>>, vector<1x4x16xf32>
    %39 = vector.shape_cast %38 : vector<1x4x16xf32> to vector<4x16xf32>
    %c0_18 = arith.constant 0 : index
    %c0_19 = arith.constant 0 : index
    %c64 = arith.constant 64 : index
    %40 = vector.load %arg2[%c0_18, %c0_19, %c64] : memref<1x4x128xf32, #tpu.memory_space<vmem>>, vector<1x4x16xf32>
    %41 = vector.shape_cast %40 : vector<1x4x16xf32> to vector<4x16xf32>
    %c0_20 = arith.constant 0 : index
    %c0_21 = arith.constant 0 : index
    %c80 = arith.constant 80 : index
    %42 = vector.load %arg2[%c0_20, %c0_21, %c80] : memref<1x4x128xf32, #tpu.memory_space<vmem>>, vector<1x4x16xf32>
    %43 = vector.shape_cast %42 : vector<1x4x16xf32> to vector<4x16xf32>
    %c0_22 = arith.constant 0 : index
    %c0_23 = arith.constant 0 : index
    %c96 = arith.constant 96 : index
    %44 = vector.load %arg2[%c0_22, %c0_23, %c96] : memref<1x4x128xf32, #tpu.memory_space<vmem>>, vector<1x4x16xf32>
    %45 = vector.shape_cast %44 : vector<1x4x16xf32> to vector<4x16xf32>
    %c0_24 = arith.constant 0 : index
    %c0_25 = arith.constant 0 : index
    %c112 = arith.constant 112 : index
    %46 = vector.load %arg2[%c0_24, %c0_25, %c112] : memref<1x4x128xf32, #tpu.memory_space<vmem>>, vector<1x4x16xf32>
    %47 = vector.shape_cast %46 : vector<1x4x16xf32> to vector<4x16xf32>
    %c4 = arith.constant 4 : index
    %c0_26 = arith.constant 0 : index
    %48 = vector.load %arg6[%c4, %c0_26] : memref<8x256xf32, #tpu.memory_space<vmem>>, vector<4x16xf32>
    tpu.vector_store %arg6[%c4, %c0_26], %33 {strides = array<i32>} : memref<8x256xf32, #tpu.memory_space<vmem>>, vector<4x16xf32>,
    %cst = arith.constant 0.533333361 : f32
    %49 = vector.broadcast %cst : f32 to vector<4x16xf32>
    %50 = arith.mulf %49, %33 : vector<4x16xf32>
    %cst_27 = arith.constant 0.466666669 : f32
    %51 = vector.broadcast %cst_27 : f32 to vector<4x16xf32>
    %52 = arith.mulf %51, %35 : vector<4x16xf32>
    %53 = arith.addf %50, %52 : vector<4x16xf32>
    %c4_28 = arith.constant 4 : index
    %c16_29 = arith.constant 16 : index
    %54 = vector.load %arg6[%c4_28, %c16_29] : memref<8x256xf32, #tpu.memory_space<vmem>>, vector<4x16xf32>
    tpu.vector_store %arg6[%c4_28, %c16_29], %53 {strides = array<i32>} : memref<8x256xf32, #tpu.memory_space<vmem>>, vector<4x16xf32>,
    %cst_30 = arith.constant 0.0666666701 : f32
    %55 = vector.broadcast %cst_30 : f32 to vector<4x16xf32>
    %56 = arith.mulf %55, %33 : vector<4x16xf32>
    %cst_31 = arith.constant 0.933333337 : f32
    %57 = vector.broadcast %cst_31 : f32 to vector<4x16xf32>
    %58 = arith.mulf %57, %35 : vector<4x16xf32>
    %59 = arith.addf %56, %58 : vector<4x16xf32>
    %c4_32 = arith.constant 4 : index
    %c32_33 = arith.constant 32 : index
    %60 = vector.load %arg6[%c4_32, %c32_33] : memref<8x256xf32, #tpu.memory_space<vmem>>, vector<4x16xf32>
    tpu.vector_store %arg6[%c4_32, %c32_33], %59 {strides = array<i32>} : memref<8x256xf32, #tpu.memory_space<vmem>>, vector<4x16xf32>,
    %cst_34 = arith.constant 6.000000e-01 : f32
    %61 = vector.broadcast %cst_34 : f32 to vector<4x16xf32>
    %62 = arith.mulf %61, %35 : vector<4x16xf32>
    %cst_35 = arith.constant 4.000000e-01 : f32
    %63 = vector.broadcast %cst_35 : f32 to vector<4x16xf32>
    %64 = arith.mulf %63, %37 : vector<4x16xf32>
    %65 = arith.addf %62, %64 : vector<4x16xf32>
    %c4_36 = arith.constant 4 : index
    %c48_37 = arith.constant 48 : index
    %66 = vector.load %arg6[%c4_36, %c48_37] : memref<8x256xf32, #tpu.memory_space<vmem>>, vector<4x16xf32>
    tpu.vector_store %arg6[%c4_36, %c48_37], %65 {strides = array<i32>} : memref<8x256xf32, #tpu.memory_space<vmem>>, vector<4x16xf32>,
    %cst_38 = arith.constant 0.13333334 : f32
    %67 = vector.broadcast %cst_38 : f32 to vector<4x16xf32>
    %68 = arith.mulf %67, %35 : vector<4x16xf32>
    %cst_39 = arith.constant 0.866666674 : f32
    %69 = vector.broadcast %cst_39 : f32 to vector<4x16xf32>
    %70 = arith.mulf %69, %37 : vector<4x16xf32>
    %71 = arith.addf %68, %70 : vector<4x16xf32>
    %c4_40 = arith.constant 4 : index
    %c64_41 = arith.constant 64 : index
    %72 = vector.load %arg6[%c4_40, %c64_41] : memref<8x256xf32, #tpu.memory_space<vmem>>, vector<4x16xf32>
    tpu.vector_store %arg6[%c4_40, %c64_41], %71 {strides = array<i32>} : memref<8x256xf32, #tpu.memory_space<vmem>>, vector<4x16xf32>,
    %cst_42 = arith.constant 0.666666686 : f32
    %73 = vector.broadcast %cst_42 : f32 to vector<4x16xf32>
    %74 = arith.mulf %73, %37 : vector<4x16xf32>
    %cst_43 = arith.constant 0.333333343 : f32
    %75 = vector.broadcast %cst_43 : f32 to vector<4x16xf32>
    %76 = arith.mulf %75, %39 : vector<4x16xf32>
    %77 = arith.addf %74, %76 : vector<4x16xf32>
    %c4_44 = arith.constant 4 : index
    %c80_45 = arith.constant 80 : index
    %78 = vector.load %arg6[%c4_44, %c80_45] : memref<8x256xf32, #tpu.memory_space<vmem>>, vector<4x16xf32>
    tpu.vector_store %arg6[%c4_44, %c80_45], %77 {strides = array<i32>} : memref<8x256xf32, #tpu.memory_space<vmem>>, vector<4x16xf32>,
    %cst_46 = arith.constant 2.000000e-01 : f32
    %79 = vector.broadcast %cst_46 : f32 to vector<4x16xf32>
    %80 = arith.mulf %79, %37 : vector<4x16xf32>
    %cst_47 = arith.constant 8.000000e-01 : f32
    %81 = vector.broadcast %cst_47 : f32 to vector<4x16xf32>
    %82 = arith.mulf %81, %39 : vector<4x16xf32>
    %83 = arith.addf %80, %82 : vector<4x16xf32>
    %c4_48 = arith.constant 4 : index
    %c96_49 = arith.constant 96 : index
    %84 = vector.load %arg6[%c4_48, %c96_49] : memref<8x256xf32, #tpu.memory_space<vmem>>, vector<4x16xf32>
    tpu.vector_store %arg6[%c4_48, %c96_49], %83 {strides = array<i32>} : memref<8x256xf32, #tpu.memory_space<vmem>>, vector<4x16xf32>,
    %cst_50 = arith.constant 0.733333349 : f32
    %85 = vector.broadcast %cst_50 : f32 to vector<4x16xf32>
    %86 = arith.mulf %85, %39 : vector<4x16xf32>
    %cst_51 = arith.constant 0.266666681 : f32
    %87 = vector.broadcast %cst_51 : f32 to vector<4x16xf32>
    %88 = arith.mulf %87, %41 : vector<4x16xf32>
    %89 = arith.addf %86, %88 : vector<4x16xf32>
    %c4_52 = arith.constant 4 : index
    %c112_53 = arith.constant 112 : index
    %90 = vector.load %arg6[%c4_52, %c112_53] : memref<8x256xf32, #tpu.memory_space<vmem>>, vector<4x16xf32>
    tpu.vector_store %arg6[%c4_52, %c112_53], %89 {strides = array<i32>} : memref<8x256xf32, #tpu.memory_space<vmem>>, vector<4x16xf32>,
    %cst_54 = arith.constant 0.266666681 : f32
    %91 = vector.broadcast %cst_54 : f32 to vector<4x16xf32>
    %92 = arith.mulf %91, %39 : vector<4x16xf32>
    %cst_55 = arith.constant 0.733333349 : f32
    %93 = vector.broadcast %cst_55 : f32 to vector<4x16xf32>
    %94 = arith.mulf %93, %41 : vector<4x16xf32>
    %95 = arith.addf %92, %94 : vector<4x16xf32>
    %c4_56 = arith.constant 4 : index
    %c128 = arith.constant 128 : index
    %96 = vector.load %arg6[%c4_56, %c128] : memref<8x256xf32, #tpu.memory_space<vmem>>, vector<4x16xf32>
    tpu.vector_store %arg6[%c4_56, %c128], %95 {strides = array<i32>} : memref<8x256xf32, #tpu.memory_space<vmem>>, vector<4x16xf32>,
    %cst_57 = arith.constant 8.000000e-01 : f32
    %97 = vector.broadcast %cst_57 : f32 to vector<4x16xf32>
    %98 = arith.mulf %97, %41 : vector<4x16xf32>
    %cst_58 = arith.constant 2.000000e-01 : f32
    %99 = vector.broadcast %cst_58 : f32 to vector<4x16xf32>
    %100 = arith.mulf %99, %43 : vector<4x16xf32>
    %101 = arith.addf %98, %100 : vector<4x16xf32>
    %c4_59 = arith.constant 4 : index
    %c144 = arith.constant 144 : index
    %102 = vector.load %arg6[%c4_59, %c144] : memref<8x256xf32, #tpu.memory_space<vmem>>, vector<4x16xf32>
    tpu.vector_store %arg6[%c4_59, %c144], %101 {strides = array<i32>} : memref<8x256xf32, #tpu.memory_space<vmem>>, vector<4x16xf32>,
    %cst_60 = arith.constant 0.333333343 : f32
    %103 = vector.broadcast %cst_60 : f32 to vector<4x16xf32>
    %104 = arith.mulf %103, %41 : vector<4x16xf32>
    %cst_61 = arith.constant 0.666666686 : f32
    %105 = vector.broadcast %cst_61 : f32 to vector<4x16xf32>
    %106 = arith.mulf %105, %43 : vector<4x16xf32>
    %107 = arith.addf %104, %106 : vector<4x16xf32>
    %c4_62 = arith.constant 4 : index
    %c160 = arith.constant 160 : index
    %108 = vector.load %arg6[%c4_62, %c160] : memref<8x256xf32, #tpu.memory_space<vmem>>, vector<4x16xf32>
    tpu.vector_store %arg6[%c4_62, %c160], %107 {strides = array<i32>} : memref<8x256xf32, #tpu.memory_space<vmem>>, vector<4x16xf32>,
    %cst_63 = arith.constant 0.866666674 : f32
    %109 = vector.broadcast %cst_63 : f32 to vector<4x16xf32>
    %110 = arith.mulf %109, %43 : vector<4x16xf32>
    %cst_64 = arith.constant 0.13333334 : f32
    %111 = vector.broadcast %cst_64 : f32 to vector<4x16xf32>
    %112 = arith.mulf %111, %45 : vector<4x16xf32>
    %113 = arith.addf %110, %112 : vector<4x16xf32>
    %c4_65 = arith.constant 4 : index
    %c176 = arith.constant 176 : index
    %114 = vector.load %arg6[%c4_65, %c176] : memref<8x256xf32, #tpu.memory_space<vmem>>, vector<4x16xf32>
    tpu.vector_store %arg6[%c4_65, %c176], %113 {strides = array<i32>} : memref<8x256xf32, #tpu.memory_space<vmem>>, vector<4x16xf32>,
    %cst_66 = arith.constant 4.000000e-01 : f32
    %115 = vector.broadcast %cst_66 : f32 to vector<4x16xf32>
    %116 = arith.mulf %115, %43 : vector<4x16xf32>
    %cst_67 = arith.constant 6.000000e-01 : f32
    %117 = vector.broadcast %cst_67 : f32 to vector<4x16xf32>
    %118 = arith.mulf %117, %45 : vector<4x16xf32>
    %119 = arith.addf %116, %118 : vector<4x16xf32>
    %c4_68 = arith.constant 4 : index
    %c192 = arith.constant 192 : index
    %120 = vector.load %arg6[%c4_68, %c192] : memref<8x256xf32, #tpu.memory_space<vmem>>, vector<4x16xf32>
    tpu.vector_store %arg6[%c4_68, %c192], %119 {strides = array<i32>} : memref<8x256xf32, #tpu.memory_space<vmem>>, vector<4x16xf32>,
    %cst_69 = arith.constant 0.933333337 : f32
    %121 = vector.broadcast %cst_69 : f32 to vector<4x16xf32>
    %122 = arith.mulf %121, %45 : vector<4x16xf32>
    %cst_70 = arith.constant 0.0666666701 : f32
    %123 = vector.broadcast %cst_70 : f32 to vector<4x16xf32>
    %124 = arith.mulf %123, %47 : vector<4x16xf32>
    %125 = arith.addf %122, %124 : vector<4x16xf32>
    %c4_71 = arith.constant 4 : index
    %c208 = arith.constant 208 : index
    %126 = vector.load %arg6[%c4_71, %c208] : memref<8x256xf32, #tpu.memory_space<vmem>>, vector<4x16xf32>
    tpu.vector_store %arg6[%c4_71, %c208], %125 {strides = array<i32>} : memref<8x256xf32, #tpu.memory_space<vmem>>, vector<4x16xf32>,
    %cst_72 = arith.constant 0.466666669 : f32
    %127 = vector.broadcast %cst_72 : f32 to vector<4x16xf32>
    %128 = arith.mulf %127, %45 : vector<4x16xf32>
    %cst_73 = arith.constant 0.533333361 : f32
    %129 = vector.broadcast %cst_73 : f32 to vector<4x16xf32>
    %130 = arith.mulf %129, %47 : vector<4x16xf32>
    %131 = arith.addf %128, %130 : vector<4x16xf32>
    %c4_74 = arith.constant 4 : index
    %c224 = arith.constant 224 : index
    %132 = vector.load %arg6[%c4_74, %c224] : memref<8x256xf32, #tpu.memory_space<vmem>>, vector<4x16xf32>
    tpu.vector_store %arg6[%c4_74, %c224], %131 {strides = array<i32>} : memref<8x256xf32, #tpu.memory_space<vmem>>, vector<4x16xf32>,
    %c4_75 = arith.constant 4 : index
    %c240 = arith.constant 240 : index
    %133 = vector.load %arg6[%c4_75, %c240] : memref<8x256xf32, #tpu.memory_space<vmem>>, vector<4x16xf32>
    tpu.vector_store %arg6[%c4_75, %c240], %47 {strides = array<i32>} : memref<8x256xf32, #tpu.memory_space<vmem>>, vector<4x16xf32>,
    %c0_76 = arith.constant 0 : index
    %c0_77 = arith.constant 0 : index
    %134 = vector.load %arg6[%c0_76, %c0_77] : memref<8x256xf32, #tpu.memory_space<vmem>>, vector<8x256xf32>
    %c17_i32 = arith.constant 17 : i32
    %135 = tpu.dynamic_rotate %134 by %c17_i32 dim 1 : vector<8x256xf32>, i32 -> vector<8x256xf32>
    %cst_78 = arith.constant 0.000000e+00 : f32
    %136 = vector.shape_cast %25 : vector<1x256xi1> to vector<1x256xi1>
    %137 = vector.broadcast %136 : vector<1x256xi1> to vector<8x256xi1>
    %138 = vector.broadcast %cst_78 : f32 to vector<8x256xf32>
    %139 = arith.select %137, %135, %138 : vector<8x256xi1>, vector<8x256xf32>
    %c0_79 = arith.constant 0 : index
    %c0_80 = arith.constant 0 : index
    %140 = vector.load %arg7[%c0_79, %c0_80] : memref<72x256xf32, #tpu.memory_space<vmem>>, vector<8x256xf32>
    tpu.vector_store %arg7[%c0_79, %c0_80], %139 {strides = array<i32>} : memref<72x256xf32, #tpu.memory_space<vmem>>, vector<8x256xf32>,
    %c16_i32_81 = arith.constant 16 : i32
    %141 = tpu.dynamic_rotate %134 by %c16_i32_81 dim 1 : vector<8x256xf32>, i32 -> vector<8x256xf32>
    %cst_82 = arith.constant 0.000000e+00 : f32
    %142 = vector.shape_cast %22 : vector<1x256xi1> to vector<1x256xi1>
    %143 = vector.broadcast %142 : vector<1x256xi1> to vector<8x256xi1>
    %144 = vector.broadcast %cst_82 : f32 to vector<8x256xf32>
    %145 = arith.select %143, %141, %144 : vector<8x256xi1>, vector<8x256xf32>
    %c8 = arith.constant 8 : index
    %c0_83 = arith.constant 0 : index
    %146 = vector.load %arg7[%c8, %c0_83] : memref<72x256xf32, #tpu.memory_space<vmem>>, vector<8x256xf32>
    tpu.vector_store %arg7[%c8, %c0_83], %145 {strides = array<i32>} : memref<72x256xf32, #tpu.memory_space<vmem>>, vector<8x256xf32>,
    %c15_i32 = arith.constant 15 : i32
    %147 = tpu.dynamic_rotate %134 by %c15_i32 dim 1 : vector<8x256xf32>, i32 -> vector<8x256xf32>
    %cst_84 = arith.constant 0.000000e+00 : f32
    %148 = vector.shape_cast %26 : vector<1x256xi1> to vector<1x256xi1>
    %149 = vector.broadcast %148 : vector<1x256xi1> to vector<8x256xi1>
    %150 = vector.broadcast %cst_84 : f32 to vector<8x256xf32>
    %151 = arith.select %149, %147, %150 : vector<8x256xi1>, vector<8x256xf32>
    %c16_85 = arith.constant 16 : index
    %c0_86 = arith.constant 0 : index
    %152 = vector.load %arg7[%c16_85, %c0_86] : memref<72x256xf32, #tpu.memory_space<vmem>>, vector<8x256xf32>
    tpu.vector_store %arg7[%c16_85, %c0_86], %151 {strides = array<i32>} : memref<72x256xf32, #tpu.memory_space<vmem>>, vector<8x256xf32>,
    %c1_i32_87 = arith.constant 1 : i32
    %153 = tpu.dynamic_rotate %134 by %c1_i32_87 dim 1 : vector<8x256xf32>, i32 -> vector<8x256xf32>
    %cst_88 = arith.constant 0.000000e+00 : f32
    %154 = vector.shape_cast %18 : vector<1x256xi1> to vector<1x256xi1>
    %155 = vector.broadcast %154 : vector<1x256xi1> to vector<8x256xi1>
    %156 = vector.broadcast %cst_88 : f32 to vector<8x256xf32>
    %157 = arith.select %155, %153, %156 : vector<8x256xi1>, vector<8x256xf32>
    %c24 = arith.constant 24 : index
    %c0_89 = arith.constant 0 : index
    %158 = vector.load %arg7[%c24, %c0_89] : memref<72x256xf32, #tpu.memory_space<vmem>>, vector<8x256xf32>
    tpu.vector_store %arg7[%c24, %c0_89], %157 {strides = array<i32>} : memref<72x256xf32, #tpu.memory_space<vmem>>, vector<8x256xf32>,
    %c32_90 = arith.constant 32 : index
    %c0_91 = arith.constant 0 : index
    %159 = vector.load %arg7[%c32_90, %c0_91] : memref<72x256xf32, #tpu.memory_space<vmem>>, vector<8x256xf32>
    tpu.vector_store %arg7[%c32_90, %c0_91], %134 {strides = array<i32>} : memref<72x256xf32, #tpu.memory_space<vmem>>, vector<8x256xf32>,
    %c255_i32 = arith.constant 255 : i32
    %160 = tpu.dynamic_rotate %134 by %c255_i32 dim 1 : vector<8x256xf32>, i32 -> vector<8x256xf32>
    %cst_92 = arith.constant 0.000000e+00 : f32
    %161 = vector.shape_cast %20 : vector<1x256xi1> to vector<1x256xi1>
    %162 = vector.broadcast %161 : vector<1x256xi1> to vector<8x256xi1>
    %163 = vector.broadcast %cst_92 : f32 to vector<8x256xf32>
    %164 = arith.select %162, %160, %163 : vector<8x256xi1>, vector<8x256xf32>
    %c40 = arith.constant 40 : index
    %c0_93 = arith.constant 0 : index
    %165 = vector.load %arg7[%c40, %c0_93] : memref<72x256xf32, #tpu.memory_space<vmem>>, vector<8x256xf32>
    tpu.vector_store %arg7[%c40, %c0_93], %164 {strides = array<i32>} : memref<72x256xf32, #tpu.memory_space<vmem>>, vector<8x256xf32>,
    %c241_i32 = arith.constant 241 : i32
    %166 = tpu.dynamic_rotate %134 by %c241_i32 dim 1 : vector<8x256xf32>, i32 -> vector<8x256xf32>
    %cst_94 = arith.constant 0.000000e+00 : f32
    %167 = vector.shape_cast %27 : vector<1x256xi1> to vector<1x256xi1>
    %168 = vector.broadcast %167 : vector<1x256xi1> to vector<8x256xi1>
    %169 = vector.broadcast %cst_94 : f32 to vector<8x256xf32>
    %170 = arith.select %168, %166, %169 : vector<8x256xi1>, vector<8x256xf32>
    %c48_95 = arith.constant 48 : index
    %c0_96 = arith.constant 0 : index
    %171 = vector.load %arg7[%c48_95, %c0_96] : memref<72x256xf32, #tpu.memory_space<vmem>>, vector<8x256xf32>
    tpu.vector_store %arg7[%c48_95, %c0_96], %170 {strides = array<i32>} : memref<72x256xf32, #tpu.memory_space<vmem>>, vector<8x256xf32>,
    %c240_i32_97 = arith.constant 240 : i32
    %172 = tpu.dynamic_rotate %134 by %c240_i32_97 dim 1 : vector<8x256xf32>, i32 -> vector<8x256xf32>
    %cst_98 = arith.constant 0.000000e+00 : f32
    %173 = vector.shape_cast %24 : vector<1x256xi1> to vector<1x256xi1>
    %174 = vector.broadcast %173 : vector<1x256xi1> to vector<8x256xi1>
    %175 = vector.broadcast %cst_98 : f32 to vector<8x256xf32>
    %176 = arith.select %174, %172, %175 : vector<8x256xi1>, vector<8x256xf32>
    %c56 = arith.constant 56 : index
    %c0_99 = arith.constant 0 : index
    %177 = vector.load %arg7[%c56, %c0_99] : memref<72x256xf32, #tpu.memory_space<vmem>>, vector<8x256xf32>
    tpu.vector_store %arg7[%c56, %c0_99], %176 {strides = array<i32>} : memref<72x256xf32, #tpu.memory_space<vmem>>, vector<8x256xf32>,
    %c239_i32 = arith.constant 239 : i32
    %178 = tpu.dynamic_rotate %134 by %c239_i32 dim 1 : vector<8x256xf32>, i32 -> vector<8x256xf32>
    %cst_100 = arith.constant 0.000000e+00 : f32
    %179 = vector.shape_cast %28 : vector<1x256xi1> to vector<1x256xi1>
    %180 = vector.broadcast %179 : vector<1x256xi1> to vector<8x256xi1>
    %181 = vector.broadcast %cst_100 : f32 to vector<8x256xf32>
    %182 = arith.select %180, %178, %181 : vector<8x256xi1>, vector<8x256xf32>
    %c64_101 = arith.constant 64 : index
    %c0_102 = arith.constant 0 : index
    %183 = vector.load %arg7[%c64_101, %c0_102] : memref<72x256xf32, #tpu.memory_space<vmem>>, vector<8x256xf32>
    tpu.vector_store %arg7[%c64_101, %c0_102], %182 {strides = array<i32>} : memref<72x256xf32, #tpu.memory_space<vmem>>, vector<8x256xf32>,
    %c0_103 = arith.constant 0 : index
    %c0_104 = arith.constant 0 : index
    %184 = vector.load %arg3[%c0_103, %c0_104] : memref<8x72xf32, #tpu.memory_space<vmem>>, vector<8x72xf32>
    %c0_105 = arith.constant 0 : index
    %c0_106 = arith.constant 0 : index
    %185 = vector.load %arg7[%c0_105, %c0_106] : memref<72x256xf32, #tpu.memory_space<vmem>>, vector<72x256xf32>
    %cst_107 = arith.constant dense<0.000000e+00> : vector<8x256xf32>
    %186 = tpu.matmul %184, %185, %cst_107 {dimension_numbers = #tpu.dot_dimension_numbers<[1], [0], [0], [1], [0, 0, 1, 1], [], []>} : vector<8x72xf32>, vector<72x256xf32>, vector<8x256xf32> -> vector<8x256xf32>
    %c0_108 = arith.constant 0 : index
    %c0_109 = arith.constant 0 : index
    %187 = vector.load %arg4[%c0_108, %c0_109] : memref<8x1xf32, #tpu.memory_space<vmem>>, vector<8x1xf32>
    %188 = vector.broadcast %187 : vector<8x1xf32> to vector<8x256xf32>
    %189 = arith.addf %186, %188 : vector<8x256xf32>
    %cst_110 = arith.constant 0.000000e+00 : f32
    %cst_111 = arith.constant 6.000000e+00 : f32
    %190 = vector.broadcast %cst_110 : f32 to vector<8x256xf32>
    %191 = arith.maximumf %190, %189 : vector<8x256xf32>
    %192 = vector.broadcast %cst_111 : f32 to vector<8x256xf32>
    %193 = arith.minimumf %192, %191 : vector<8x256xf32>
    %c0_112 = arith.constant 0 : index
    %c0_113 = arith.constant 0 : index
    %c0_114 = arith.constant 0 : index
    %194 = vector.load %arg5[%c0_112, %c0_113, %c0_114] : memref<1x8x256xf32, #tpu.memory_space<vmem>>, vector<1x8x256xf32>
    %195 = vector.shape_cast %194 : vector<1x8x256xf32> to vector<8x256xf32>
    %196 = vector.shape_cast %193 : vector<8x256xf32> to vector<1x8x256xf32>
    tpu.vector_store %arg5[%c0_112, %c0_113, %c0_114], %196 {strides = array<i32>} : memref<1x8x256xf32, #tpu.memory_space<vmem>>, vector<1x8x256xf32>,
    return
  }
  func.func @transform_0(%arg0: i32) -> (i32, i32, i32) {
    %c0_i32 = arith.constant 0 : i32
    %c0_i32_0 = arith.constant 0 : i32
    %c0_i32_1 = arith.constant 0 : i32
    return %arg0, %c0_i32, %c0_i32_0 : i32, i32, i32
  }
  func.func @transform_1(%arg0: i32) -> (i32, i32, i32) {
    %c0_i32 = arith.constant 0 : i32
    %c0_i32_0 = arith.constant 0 : i32
    %c0_i32_1 = arith.constant 0 : i32
    return %arg0, %c0_i32, %c0_i32_0 : i32, i32, i32
  }
  func.func @transform_2(%arg0: i32) -> (i32, i32) {
    %c0_i32 = arith.constant 0 : i32
    %c0_i32_0 = arith.constant 0 : i32
    %c0_i32_1 = arith.constant 0 : i32
    return %c0_i32, %c0_i32_0 : i32, i32
  }
  func.func @transform_3(%arg0: i32) -> (i32, i32) {
    %c0_i32 = arith.constant 0 : i32
    %c0_i32_0 = arith.constant 0 : i32
    %c0_i32_1 = arith.constant 0 : i32
    return %c0_i32, %c0_i32_0 : i32, i32
  }
  func.func @transform_4(%arg0: i32) -> (i32, i32, i32) {
    %c0_i32 = arith.constant 0 : i32
    %c0_i32_0 = arith.constant 0 : i32
    %c0_i32_1 = arith.constant 0 : i32
    return %arg0, %c0_i32, %c0_i32_0 : i32, i32, i32
  }
}

</mosaic_0001>

<llo_original>
// kernel: conv_ax_upsampler.1
$region0: #{conv_ax_upsampler.1}
  #allocation0 [shape = 'u32[]', space=smem, size = 0x4, offset = 0x4, fixed_abs, tag = 'smem constant byte address 0x4 - core index']
  #allocation1 [shape = 'u32[144,128]{1,0:T(1,128)}', space=vmem, size = 0x12000, scoped, tag = 'internal scratch']
  #allocation2 [shape = 'f32[8,256]{1,0:T(8,128)}', space=vmem, size = 0x2000, scoped, tag = 'scratch operand']
  #allocation3 [shape = 'f32[72,256]{1,0:T(8,128)}', space=vmem, size = 0x12000, scoped, tag = 'scratch operand']
  %s0 = inlined_call_operand.vmem [shape: f32[2,4,256], index: 0, kind: input, shape index: {}]
  %s1 = inlined_call_operand.vmem [shape: f32[2,4,128], index: 1, kind: input, shape index: {}]
  %s2 = inlined_call_operand.vmem [shape: f32[8,72], index: 2, kind: input, shape index: {}]
  %s3 = inlined_call_operand.vmem [shape: f32[8,1], index: 3, kind: input, shape index: {}]
  %s4 = inlined_call_operand.vmem [shape: f32[2,8,256], index: 4, kind: output, shape index: {}]
  %s5 = sld [smem:[#allocation0]]
  $region49: #{conv_ax_upsampler.1} parent=0
    _
  %s7 = ssub.s32 1, %s5
  %s8 = scalar_select 0, %s7, %s5
  loop: start=0, step=1, limit=4
  $region2: #{conv_ax_upsampler.1} parent=0 // loop_pre_header
    _
  $region3: #{conv_ax_upsampler.1} parent=0 // loop_header
    %s10 = sphi 0, %s14
    %p11 = scmp.ge.s32.totalorder %s10, 4
    %s20 = sphi 0, %s22
    %s23 = sphi 0, %s20
    %s24 = sphi 0, %s23
    %s40 = sphi 0, %s24
    %s46 = sphi 0, %s48
    %s49 = sphi 0, %s46
    %s50 = sphi 0, %s49
    %s66 = sphi 0, %s50
    %s70 = sphi 0, %s70
    %s72 = sphi 0, %s70
    %s73 = sphi 0, %s72
    %s87 = sphi 0, %s73
    %s91 = sphi 0, %s91
    %s93 = sphi 0, %s91
    %s94 = sphi 0, %s93
    %s108 = sphi 0, %s94
    %s114 = sphi 0, %s116
    %s117 = sphi 0, %s114
    %s118 = sphi 0, %s117
    %s134 = sphi 0, %s118
  $region4: #{conv_ax_upsampler.1} parent=0 // loop_header_branch
    %13 = sbr.rel (%p11) target = $region8
  $region5: #{conv_ax_upsampler.1} parent=0 // loop_body
    %s15 = ssub.s32 %s10, 1
    %s16 = ssub.s32 %s10, 2
    %s17 = sadd.s32 %s10, 1
    %s18 = ssub.s32 %s10, %s17
    %p19 = scmp.eq.s32.totalorder %s18, 0
    %s21 = sadd.s32 %s20, 1
    %s22 = scalar_select %p19, %s20, %s21
    %p25 = pneg %p19
    %p26 = scmp.eq.s32.totalorder %s10, 1
    %p27 = por %p25, %p26
    %p28 = scmp.ne.s32.totalorder %s20, %s23
    %p29 = scmp.eq.s32.totalorder %s10, 0
    %p30 = por %p28, %p29
    %p31 = scmp.ne.s32.totalorder %s20, %s23
    %p32 = scmp.eq.s32.totalorder %s15, 1
    %p33 = por %p31, %p32
    %p34 = scmp.ne.s32.totalorder %s23, %s24
    %p35 = scmp.eq.s32.totalorder %s15, 0
    %p36 = por %p34, %p35
    %p37 = scmp.ne.s32.totalorder %s23, %s24
    %p38 = scmp.eq.s32.totalorder %s16, 1
    %p39 = por %p37, %p38
    %p41 = scmp.ne.s32.totalorder %s24, %s40
    %p42 = scmp.eq.s32.totalorder %s16, 0
    %p43 = por %p41, %p42
    %s44 = ssub.s32 %s10, %s17
    %p45 = scmp.eq.s32.totalorder %s44, 0
    %s47 = sadd.s32 %s46, 1
    %s48 = scalar_select %p45, %s46, %s47
    %p51 = pneg %p45
    %p52 = scmp.eq.s32.totalorder %s10, 1
    %p53 = por %p51, %p52
    %p54 = scmp.ne.s32.totalorder %s46, %s49
    %p55 = scmp.eq.s32.totalorder %s10, 0
    %p56 = por %p54, %p55
    %p57 = scmp.ne.s32.totalorder %s46, %s49
    %p58 = scmp.eq.s32.totalorder %s15, 1
    %p59 = por %p57, %p58
    %p60 = scmp.ne.s32.totalorder %s49, %s50
    %p61 = scmp.eq.s32.totalorder %s15, 0
    %p62 = por %p60, %p61
    %p63 = scmp.ne.s32.totalorder %s49, %s50
    %p64 = scmp.eq.s32.totalorder %s16, 1
    %p65 = por %p63, %p64
    %p67 = scmp.ne.s32.totalorder %s50, %s66
    %p68 = scmp.eq.s32.totalorder %s16, 0
    %p69 = por %p67, %p68
    %s71 = sadd.s32 %s70, 1
    %p74 = scmp.eq.s32.totalorder %s10, 1
    %p75 = scmp.ne.s32.totalorder %s70, %s72
    %p76 = scmp.eq.s32.totalorder %s10, 0
    %p77 = por %p75, %p76
    %p78 = scmp.ne.s32.totalorder %s70, %s72
    %p79 = scmp.eq.s32.totalorder %s15, 1
    %p80 = por %p78, %p79
    %p81 = scmp.ne.s32.totalorder %s72, %s73
    %p82 = scmp.eq.s32.totalorder %s15, 0
    %p83 = por %p81, %p82
    %p84 = scmp.ne.s32.totalorder %s72, %s73
    %p85 = scmp.eq.s32.totalorder %s16, 1
    %p86 = por %p84, %p85
    %p88 = scmp.ne.s32.totalorder %s73, %s87
    %p89 = scmp.eq.s32.totalorder %s16, 0
    %p90 = por %p88, %p89
    %s92 = sadd.s32 %s91, 1
    %p95 = scmp.eq.s32.totalorder %s10, 1
    %p96 = scmp.ne.s32.totalorder %s91, %s93
    %p97 = scmp.eq.s32.totalorder %s10, 0
    %p98 = por %p96, %p97
    %p99 = scmp.ne.s32.totalorder %s91, %s93
    %p100 = scmp.eq.s32.totalorder %s15, 1
    %p101 = por %p99, %p100
    %p102 = scmp.ne.s32.totalorder %s93, %s94
    %p103 = scmp.eq.s32.totalorder %s15, 0
    %p104 = por %p102, %p103
    %p105 = scmp.ne.s32.totalorder %s93, %s94
    %p106 = scmp.eq.s32.totalorder %s16, 1
    %p107 = por %p105, %p106
    %p109 = scmp.ne.s32.totalorder %s94, %s108
    %p110 = scmp.eq.s32.totalorder %s16, 0
    %p111 = por %p109, %p110
    %s112 = ssub.s32 %s10, %s17
    %p113 = scmp.eq.s32.totalorder %s112, 0
    %s115 = sadd.s32 %s114, 1
    %s116 = scalar_select %p113, %s114, %s115
    %p119 = pneg %p113
    %p120 = scmp.eq.s32.totalorder %s10, 1
    %p121 = por %p119, %p120
    %p122 = scmp.ne.s32.totalorder %s114, %s117
    %p123 = scmp.eq.s32.totalorder %s10, 0
    %p124 = por %p122, %p123
    %p125 = scmp.ne.s32.totalorder %s114, %s117
    %p126 = scmp.eq.s32.totalorder %s15, 1
    %p127 = por %p125, %p126
    %p128 = scmp.ne.s32.totalorder %s117, %s118
    %p129 = scmp.eq.s32.totalorder %s15, 0
    %p130 = por %p128, %p129
    %p131 = scmp.ne.s32.totalorder %s117, %s118
    %p132 = scmp.eq.s32.totalorder %s16, 1
    %p133 = por %p131, %p132
    %p135 = scmp.ne.s32.totalorder %s118, %s134
    %p136 = scmp.eq.s32.totalorder %s16, 0
    %p137 = por %p135, %p136
    %p138 = scmp.le.s32.totalorder 1, %s10
    %p139 = scmp.lt.s32.totalorder %s10, 3
    %p140 = pnand %p138, %p139
    %p141 = pneg %p140
    // Predicated region
    $region9: #{conv_ax_upsampler.1} parent=5 // pred_check
      _
    $region10: #{conv_ax_upsampler.1} parent=5 // pred_check_branch
      %143 = sbr.rel (%p140) target = $region12
    $region11: #{conv_ax_upsampler.1} parent=5 // pred_region
      %s144 = ssub.s32 %s10, 1
      // Predicated region
      $region13: #{conv_ax_upsampler.1} parent=11 // pred_check
        %p145 = pneg %p83
      $region14: #{conv_ax_upsampler.1} parent=11 // pred_check_branch
        %147 = sbr.rel (%p145) target = $region16
      $region15: #{conv_ax_upsampler.1} parent=11 // pred_region
        _
      $region16: #{conv_ax_upsampler.1} parent=11 // pred_fallthru
        _
      // Predicated region
      $region17: #{conv_ax_upsampler.1} parent=11 // pred_check
        %p148 = pneg %p104
      $region18: #{conv_ax_upsampler.1} parent=11 // pred_check_branch
        %150 = sbr.rel (%p148) target = $region20
      $region19: #{conv_ax_upsampler.1} parent=11 // pred_region
        _
      $region20: #{conv_ax_upsampler.1} parent=11 // pred_fallthru
        _
    $region12: #{conv_ax_upsampler.1} parent=5 // pred_fallthru
      _
    %p151 = scmp.lt.s32.totalorder %s10, 2
    // Predicated region
    $region21: #{conv_ax_upsampler.1} parent=5 // pred_check
      %p152 = pneg %p151
    $region22: #{conv_ax_upsampler.1} parent=5 // pred_check_branch
      %154 = sbr.rel (%p152) target = $region24
    $region23: #{conv_ax_upsampler.1} parent=5 // pred_region
      // Predicated region
      $region25: #{conv_ax_upsampler.1} parent=23 // pred_check
        %p155 = pneg %p30
      $region26: #{conv_ax_upsampler.1} parent=23 // pred_check_branch
        %157 = sbr.rel (%p155) target = $region28
      $region27: #{conv_ax_upsampler.1} parent=23 // pred_region
        %p158 = scmp.lt.s32.totalorder %s10, 1
        %s159 = scalar_select %p158, %s10, 1
        %s160 = smul.addr %s159, 2
        %s161 = smul.addr %s160, 4
        %s162 = scalar_lea.vmem %s0, %s161
      $region28: #{conv_ax_upsampler.1} parent=23 // pred_fallthru
        _
      // Predicated region
      $region29: #{conv_ax_upsampler.1} parent=23 // pred_check
        %p163 = pneg %p56
      $region30: #{conv_ax_upsampler.1} parent=23 // pred_check_branch
        %165 = sbr.rel (%p163) target = $region32
      $region31: #{conv_ax_upsampler.1} parent=23 // pred_region
        %p166 = scmp.lt.s32.totalorder %s10, 1
        %s167 = scalar_select %p166, %s10, 1
        %s168 = smul.addr %s167, 4
        %s169 = scalar_lea.vmem %s1, %s168
      $region32: #{conv_ax_upsampler.1} parent=23 // pred_fallthru
        _
    $region24: #{conv_ax_upsampler.1} parent=5 // pred_fallthru
      _
    %p170 = scmp.le.s32.totalorder 1, %s10
    %p171 = scmp.lt.s32.totalorder %s10, 3
    %p172 = pnand %p170, %p171
    %p173 = pneg %p172
    // Predicated region
    $region33: #{conv_ax_upsampler.1} parent=5 // pred_check
      _
    $region34: #{conv_ax_upsampler.1} parent=5 // pred_check_branch
      %175 = sbr.rel (%p172) target = $region36
    $region35: #{conv_ax_upsampler.1} parent=5 // pred_region
      %s176 = ssub.s32 %s10, 1
      %p177 = scmp.lt.s32.totalorder %s15, 1
      %s178 = scalar_select %p177, %s15, 1
      %s179 = smul.addr %s178, 2
      %s180 = smul.addr %s179, 4
      %s181 = scalar_lea.vmem %s0, %s180
      %p182 = pneg %p36
      %p183 = pneg %p33
      %p184 = scmp.lt.s32.totalorder %s15, 1
      %s185 = scalar_select %p184, %s15, 1
      %s186 = smul.addr %s185, 4
      %s187 = scalar_lea.vmem %s1, %s186
      %p188 = pneg %p62
      %p189 = pneg %p59
      %p190 = pneg %p83
      %p191 = pneg %p80
      %p192 = pneg %p104
      %p193 = pneg %p101
      %p194 = pneg %p130
      %p195 = pneg %p127
      %p196 = scmp.lt.s32.totalorder %s15, 1
      %s197 = scalar_select %p196, %s15, 1
      %s198 = smul.addr %s197, 2
      %s199 = smul.addr %s198, 8
      %s200 = scalar_lea.vmem %s4, %s199
      %p201 = scmp.lt.s32.totalorder %s15, 1
      %s202 = scalar_select %p201, %s15, 1
      %s203 = smul.addr %s202, 2
      %s204 = smul.addr %s203, 4
      %s205 = scalar_lea.vmem %s0, %s204
      %p206 = scmp.lt.s32.totalorder %s15, 1
      %s207 = scalar_select %p206, %s15, 1
      %s208 = smul.addr %s207, 4
      %s209 = scalar_lea.vmem %s1, %s208
      %p210 = scmp.lt.s32.totalorder %s15, 1
      %s211 = scalar_select %p210, %s15, 1
      %s212 = smul.addr %s211, 2
      %s213 = smul.addr %s212, 8
      %s214 = scalar_lea.vmem %s4, %s213
      %v215 = vlaneseq
      %v216 = vand.u32 %v215, 127
      %v217 = vadd.s32 %v216, 128
      %vm218 = vcmp.lt.s32.totalorder %v216, 0
      %v219 = vsub.s32 0, %v216
      %v220 = vsel %vm218, %v219, %v216
      %v221 = vshrl.u32 %v220, 4
      %v222 = vand.u32 %v220, 15
      %v223 = vsub.s32 0, %v222
      %v224 = vsel %vm218, %v223, %v222
      %vm225 = vcmp.lt.s32.totalorder %v217, 0
      %v226 = vsub.s32 0, %v217
      %v227 = vsel %vm225, %v226, %v217
      %v228 = vshrl.u32 %v227, 4
      %v229 = vand.u32 %v227, 15
      %v230 = vsub.s32 0, %v229
      %v231 = vsel %vm225, %v230, %v229
      %vm232 = vcmp.ne.s32.totalorder %v224, 0
      %vm233 = vcmp.ne.s32.totalorder %v231, 0
      %vm234 = vcmp.lt.s32.totalorder %v224, 0
      %vm235 = vcmp.lt.s32.totalorder %v231, 0
      %vm236 = vmand %vm234, %vm232
      %vm237 = vmand %vm235, %vm233
      %v238 = vadd.s32 %v224, 16
      %v239 = vadd.s32 %v231, 16
      %v240 = vsel %vm236, %v238, %v224
      %v241 = vsel %vm237, %v239, %v231
      %vm242 = vcmp.ge.s32.totalorder %v240, 1
      %vm243 = vcmp.ge.s32.totalorder %v241, 1
      %vm244 = vcmp.le.s32.totalorder %v240, 14
      %vm245 = vcmp.le.s32.totalorder %v241, 14
      %vm246 = vcmp.ge.s32.totalorder %v216, 16
      %vm247 = vcmp.ge.s32.totalorder %v217, 16
      %vm248 = vcmp.lt.s32.totalorder %v216, 240
      %vm249 = vcmp.lt.s32.totalorder %v217, 240
      %vm250 = vmand %vm246, %vm242
      %vm251 = vmand %vm247, %vm243
      %vm252 = vmand %vm246, %vm244
      %vm253 = vmand %vm247, %vm245
      %vm254 = vmand %vm248, %vm242
      %vm255 = vmand %vm249, %vm243
      %vm256 = vmand %vm248, %vm244
      %vm257 = vmand %vm249, %vm245
      %v258 = vld [vmem:[%s205] sm:$0xff]
      %v260 = vcombine.high %v258, %v258
      %262 = vst [vmem:[#allocation2] sm:$0xf] %v258
      %263 = vst [vmem:[#allocation2 + $0x8] sm:$0xf] %v260
      %v264 = vld [vmem:[%s209] sm:$0xf]
      %v266 = vrot.slane %v264, 4
      %vm268 = vcmask 130052
      %269 = vst.msk [vmem:[#allocation2] sm:$0xf0] %vm268, %v266
      %v270 = vmul.f32 %v264, 0.53333336
      %v271 = vmul.f32 %v264, 0.46666667
      %273 = vrot.lane.b32.xlu0 %v271, 112
      %v274 = vpop.permute.xlu0 %273
      %v276 = vadd.f32 %v270, %v274
      %v278 = vrot.slane %v276, 4
      %279 = vrot.lane.b32.xlu0 %v278, 16
      %v280 = vpop.permute.xlu0 %279
      %vm282 = vcmask 261252
      %283 = vst.msk [vmem:[#allocation2] sm:$0xf0] %vm282, %v280
      %v284 = vmul.f32 %v264, 0.06666667
      %v285 = vmul.f32 %v264, 0.93333334
      %287 = vrot.lane.b32.xlu0 %v285, 112
      %v288 = vpop.permute.xlu0 %287
      %v290 = vadd.f32 %v284, %v288
      %v292 = vrot.slane %v290, 4
      %293 = vrot.lane.b32.xlu0 %v292, 32
      %v294 = vpop.permute.xlu0 %293
      %vm296 = vcmask 392452
      %297 = vst.msk [vmem:[#allocation2] sm:$0xf0] %vm296, %v294
      %v298 = vmul.f32 %v264, 0.6
      %v299 = vmul.f32 %v264, 0.4
      %301 = vrot.lane.b32.xlu0 %v299, 112
      %v302 = vpop.permute.xlu0 %301
      %v304 = vadd.f32 %v298, %v302
      %v306 = vrot.slane %v304, 4
      %307 = vrot.lane.b32.xlu0 %v306, 32
      %v308 = vpop.permute.xlu0 %307
      %vm310 = vcmask 523652
      %311 = vst.msk [vmem:[#allocation2] sm:$0xf0] %vm310, %v308
      %v312 = vmul.f32 %v264, 0.13333334
      %v313 = vmul.f32 %v264, 0.8666667
      %315 = vrot.lane.b32.xlu0 %v313, 112
      %v316 = vpop.permute.xlu0 %315
      %v318 = vadd.f32 %v312, %v316
      %v320 = vrot.slane %v318, 4
      %321 = vrot.lane.b32.xlu0 %v320, 48
      %v322 = vpop.permute.xlu0 %321
      %vm324 = vcmask 654852
      %325 = vst.msk [vmem:[#allocation2] sm:$0xf0] %vm324, %v322
      %v326 = vmul.f32 %v264, 0.6666667
      %v327 = vmul.f32 %v264, 0.33333334
      %329 = vrot.lane.b32.xlu0 %v327, 112
      %v330 = vpop.permute.xlu0 %329
      %v332 = vadd.f32 %v326, %v330
      %v334 = vrot.slane %v332, 4
      %335 = vrot.lane.b32.xlu0 %v334, 48
      %v336 = vpop.permute.xlu0 %335
      %vm338 = vcmask 786052
      %339 = vst.msk [vmem:[#allocation2] sm:$0xf0] %vm338, %v336
      %v340 = vmul.f32 %v264, 0.2
      %v341 = vmul.f32 %v264, 0.8
      %343 = vrot.lane.b32.xlu0 %v341, 112
      %v344 = vpop.permute.xlu0 %343
      %v346 = vadd.f32 %v340, %v344
      %v348 = vrot.slane %v346, 4
      %349 = vrot.lane.b32.xlu0 %v348, 64
      %v350 = vpop.permute.xlu0 %349
      %vm352 = vcmask 917252
      %353 = vst.msk [vmem:[#allocation2] sm:$0xf0] %vm352, %v350
      %v354 = vmul.f32 %v264, 0.73333335
      %v355 = vmul.f32 %v264, 0.26666668
      %357 = vrot.lane.b32.xlu0 %v355, 112
      %v358 = vpop.permute.xlu0 %357
      %v360 = vadd.f32 %v354, %v358
      %v362 = vrot.slane %v360, 4
      %363 = vrot.lane.b32.xlu0 %v362, 64
      %v364 = vpop.permute.xlu0 %363
      %vm366 = vcmask 1048452
      %367 = vst.msk [vmem:[#allocation2] sm:$0xf0] %vm366, %v364
      %369 = vrot.lane.b32.xlu0 %v354, 112
      %v370 = vpop.permute.xlu0 %369
      %v372 = vadd.f32 %v355, %v370
      %v374 = vrot.slane %v372, 4
      %375 = vrot.lane.b32.xlu0 %v374, 80
      %v376 = vpop.permute.xlu0 %375
      %378 = vst.msk [vmem:[#allocation2 + $0x8] sm:$0xf0] %vm268, %v376
      %380 = vrot.lane.b32.xlu0 %v340, 112
      %v381 = vpop.permute.xlu0 %380
      %v383 = vadd.f32 %v341, %v381
      %v385 = vrot.slane %v383, 4
      %386 = vrot.lane.b32.xlu0 %v385, 80
      %v387 = vpop.permute.xlu0 %386
      %389 = vst.msk [vmem:[#allocation2 + $0x8] sm:$0xf0] %vm282, %v387
      %391 = vrot.lane.b32.xlu0 %v326, 112
      %v392 = vpop.permute.xlu0 %391
      %v394 = vadd.f32 %v327, %v392
      %v396 = vrot.slane %v394, 4
      %397 = vrot.lane.b32.xlu0 %v396, 96
      %v398 = vpop.permute.xlu0 %397
      %400 = vst.msk [vmem:[#allocation2 + $0x8] sm:$0xf0] %vm296, %v398
      %402 = vrot.lane.b32.xlu0 %v312, 112
      %v403 = vpop.permute.xlu0 %402
      %v405 = vadd.f32 %v313, %v403
      %v407 = vrot.slane %v405, 4
      %408 = vrot.lane.b32.xlu0 %v407, 96
      %v409 = vpop.permute.xlu0 %408
      %411 = vst.msk [vmem:[#allocation2 + $0x8] sm:$0xf0] %vm310, %v409
      %413 = vrot.lane.b32.xlu0 %v298, 112
      %v414 = vpop.permute.xlu0 %413
      %v416 = vadd.f32 %v299, %v414
      %v418 = vrot.slane %v416, 4
      %419 = vrot.lane.b32.xlu0 %v418, 112
      %v420 = vpop.permute.xlu0 %419
      %422 = vst.msk [vmem:[#allocation2 + $0x8] sm:$0xf0] %vm324, %v420
      %424 = vrot.lane.b32.xlu0 %v284, 112
      %v425 = vpop.permute.xlu0 %424
      %v427 = vadd.f32 %v285, %v425
      %v429 = vrot.slane %v427, 4
      %430 = vrot.lane.b32.xlu0 %v429, 112
      %v431 = vpop.permute.xlu0 %430
      %433 = vst.msk [vmem:[#allocation2 + $0x8] sm:$0xf0] %vm338, %v431
      %435 = vrot.lane.b32.xlu0 %v270, 112
      %v436 = vpop.permute.xlu0 %435
      %v438 = vadd.f32 %v271, %v436
      %v440 = vrot.slane %v438, 4
      %442 = vst.msk [vmem:[#allocation2 + $0x8] sm:$0xf0] %vm352, %v440
      %443 = vst.msk [vmem:[#allocation2 + $0x8] sm:$0xf0] %vm366, %v266
      %v444 = vld [vmem:[#allocation2] sm:$0xff]
      %v445 = vld [vmem:[#allocation2 + $0x8] sm:$0xff]
      %446 = vrot.lane.b32.xlu0 %v444, 17
      %v447 = vpop.permute.xlu0 %446
      %448 = vrot.lane.b32.xlu0 %v445, 17
      %v449 = vpop.permute.xlu0 %448
      %vm450 = vcmp.lt.s32.totalorder %v216, 17
      %v451 = vsel %vm450, %v447, %v449
      %v452 = vsel %vm450, %v449, %v447
      %v453 = vsel %vm250, 1, 0
      %v454 = vsel %vm251, 1, 0
      %vm455 = vcmp.eq.s32.totalorder %v453, 1
      %vm456 = vcmp.eq.s32.totalorder %v454, 1
      %v457 = vsel %vm455, %v452, 0.0
      %v458 = vsel %vm456, %v451, 0.0
      %459 = vst [vmem:[#allocation3] sm:$0xff] %v457
      %460 = vst [vmem:[#allocation3 + $0x8] sm:$0xff] %v458
      %461 = vrot.lane.b32.xlu0 %v444, 16
      %v462 = vpop.permute.xlu0 %461
      %463 = vrot.lane.b32.xlu0 %v445, 16
      %v464 = vpop.permute.xlu0 %463
      %vm465 = vcmp.lt.s32.totalorder %v216, 16
      %v466 = vsel %vm465, %v462, %v464
      %v467 = vsel %vm465, %v464, %v462
      %v468 = vsel %vm246, 1, 0
      %v469 = vsel %vm247, 1, 0
      %vm470 = vcmp.eq.s32.totalorder %v468, 1
      %vm471 = vcmp.eq.s32.totalorder %v469, 1
      %v472 = vsel %vm470, %v467, 0.0
      %v473 = vsel %vm471, %v466, 0.0
      %474 = vst [vmem:[#allocation3 + $0x10] sm:$0xff] %v472
      %475 = vst [vmem:[#allocation3 + $0x18] sm:$0xff] %v473
      %476 = vrot.lane.b32.xlu0 %v444, 15
      %v477 = vpop.permute.xlu0 %476
      %478 = vrot.lane.b32.xlu0 %v445, 15
      %v479 = vpop.permute.xlu0 %478
      %vm480 = vcmp.lt.s32.totalorder %v216, 15
      %v481 = vsel %vm480, %v477, %v479
      %v482 = vsel %vm480, %v479, %v477
      %v483 = vsel %vm252, 1, 0
      %v484 = vsel %vm253, 1, 0
      %vm485 = vcmp.eq.s32.totalorder %v483, 1
      %vm486 = vcmp.eq.s32.totalorder %v484, 1
      %v487 = vsel %vm485, %v482, 0.0
      %v488 = vsel %vm486, %v481, 0.0
      %489 = vst [vmem:[#allocation3 + $0x20] sm:$0xff] %v487
      %490 = vst [vmem:[#allocation3 + $0x28] sm:$0xff] %v488
      %491 = vrot.lane.b32.xlu0 %v444, 1
      %v492 = vpop.permute.xlu0 %491
      %493 = vrot.lane.b32.xlu0 %v445, 1
      %v494 = vpop.permute.xlu0 %493
      %vm495 = vcmp.lt.s32.totalorder %v216, 1
      %v496 = vsel %vm495, %v492, %v494
      %v497 = vsel %vm495, %v494, %v492
      %v498 = vsel %vm242, 1, 0
      %v499 = vsel %vm243, 1, 0
      %vm500 = vcmp.eq.s32.totalorder %v498, 1
      %vm501 = vcmp.eq.s32.totalorder %v499, 1
      %v502 = vsel %vm500, %v497, 0.0
      %v503 = vsel %vm501, %v496, 0.0
      %504 = vst [vmem:[#allocation3 + $0x30] sm:$0xff] %v502
      %505 = vst [vmem:[#allocation3 + $0x38] sm:$0xff] %v503
      %506 = vst [vmem:[#allocation3 + $0x40] sm:$0xff] %v444
      %507 = vst [vmem:[#allocation3 + $0x48] sm:$0xff] %v445
      %508 = vrot.lane.b32.xlu0 %v444, 127
      %v509 = vpop.permute.xlu0 %508
      %510 = vrot.lane.b32.xlu0 %v445, 127
      %v511 = vpop.permute.xlu0 %510
      %vm512 = vcmp.lt.s32.totalorder %v216, 127
      %v513 = vsel %vm512, %v509, %v511
      %v514 = vsel %vm512, %v511, %v509
      %v515 = vsel %vm244, 1, 0
      %v516 = vsel %vm245, 1, 0
      %vm517 = vcmp.eq.s32.totalorder %v515, 1
      %vm518 = vcmp.eq.s32.totalorder %v516, 1
      %v519 = vsel %vm517, %v513, 0.0
      %v520 = vsel %vm518, %v514, 0.0
      %521 = vst [vmem:[#allocation3 + $0x50] sm:$0xff] %v519
      %522 = vst [vmem:[#allocation3 + $0x58] sm:$0xff] %v520
      %523 = vrot.lane.b32.xlu0 %v444, 113
      %v524 = vpop.permute.xlu0 %523
      %525 = vrot.lane.b32.xlu0 %v445, 113
      %v526 = vpop.permute.xlu0 %525
      %vm527 = vcmp.lt.s32.totalorder %v216, 113
      %v528 = vsel %vm527, %v524, %v526
      %v529 = vsel %vm527, %v526, %v524
      %v530 = vsel %vm254, 1, 0
      %v531 = vsel %vm255, 1, 0
      %vm532 = vcmp.eq.s32.totalorder %v530, 1
      %vm533 = vcmp.eq.s32.totalorder %v531, 1
      %v534 = vsel %vm532, %v528, 0.0
      %v535 = vsel %vm533, %v529, 0.0
      %536 = vst [vmem:[#allocation3 + $0x60] sm:$0xff] %v534
      %537 = vst [vmem:[#allocation3 + $0x68] sm:$0xff] %v535
      %538 = vrot.lane.b32.xlu0 %v444, 112
      %v539 = vpop.permute.xlu0 %538
      %540 = vrot.lane.b32.xlu0 %v445, 112
      %v541 = vpop.permute.xlu0 %540
      %vm542 = vcmp.lt.s32.totalorder %v216, 112
      %v543 = vsel %vm542, %v539, %v541
      %v544 = vsel %vm542, %v541, %v539
      %v545 = vsel %vm248, 1, 0
      %v546 = vsel %vm249, 1, 0
      %vm547 = vcmp.eq.s32.totalorder %v545, 1
      %vm548 = vcmp.eq.s32.totalorder %v546, 1
      %v549 = vsel %vm547, %v543, 0.0
      %v550 = vsel %vm548, %v544, 0.0
      %551 = vst [vmem:[#allocation3 + $0x70] sm:$0xff] %v549
      %552 = vst [vmem:[#allocation3 + $0x78] sm:$0xff] %v550
      %553 = vrot.lane.b32.xlu0 %v444, 111
      %v554 = vpop.permute.xlu0 %553
      %555 = vrot.lane.b32.xlu0 %v445, 111
      %v556 = vpop.permute.xlu0 %555
      %vm557 = vcmp.lt.s32.totalorder %v216, 111
      %v558 = vsel %vm557, %v554, %v556
      %v559 = vsel %vm557, %v556, %v554
      %v560 = vsel %vm256, 1, 0
      %v561 = vsel %vm257, 1, 0
      %vm562 = vcmp.eq.s32.totalorder %v560, 1
      %vm563 = vcmp.eq.s32.totalorder %v561, 1
      %v564 = vsel %vm562, %v558, 0.0
      %v565 = vsel %vm563, %v559, 0.0
      %566 = vst [vmem:[#allocation3 + $0x80] sm:$0xff] %v564
      %567 = vst [vmem:[#allocation3 + $0x88] sm:$0xff] %v565
      %v568 = vld [vmem:[%s2] sm:$0xff]
      %v569 = vld [vmem:[#allocation3] sm:$0xff]
      %v570 = vld [vmem:[#allocation3 + $0x8] sm:$0xff]
      %v571 = vld [vmem:[#allocation3 + $0x10] sm:$0xff]
      %v572 = vld [vmem:[#allocation3 + $0x18] sm:$0xff]
      %v573 = vld [vmem:[#allocation3 + $0x20] sm:$0xff]
      %v574 = vld [vmem:[#allocation3 + $0x28] sm:$0xff]
      %v575 = vld [vmem:[#allocation3 + $0x30] sm:$0xff]
      %v576 = vld [vmem:[#allocation3 + $0x38] sm:$0xff]
      %v577 = vld [vmem:[#allocation3 + $0x40] sm:$0xff]
      %v578 = vld [vmem:[#allocation3 + $0x48] sm:$0xff]
      %v579 = vld [vmem:[#allocation3 + $0x50] sm:$0xff]
      %v580 = vld [vmem:[#allocation3 + $0x58] sm:$0xff]
      %v581 = vld [vmem:[#allocation3 + $0x60] sm:$0xff]
      %v582 = vld [vmem:[#allocation3 + $0x68] sm:$0xff]
      %v583 = vld [vmem:[#allocation3 + $0x70] sm:$0xff]
      %v584 = vld [vmem:[#allocation3 + $0x78] sm:$0xff]
      %v585 = vld [vmem:[#allocation3 + $0x80] sm:$0xff]
      %v586 = vld [vmem:[#allocation3 + $0x88] sm:$0xff]
      %v587 = vld [vmem:[%s3] sm:$0xff]
      %589 = vset.pattern.permute.xlu0 0
      %590 = vperm.xlu0 %589, %v587
      %v591 = vpop.permute.xlu0 %590
      %vm593 = vcmask 588800
      %v595 = vsel %vm593, %v568, 0
      %597 = vmatprep.subr.mxu0 0.0
      %598 = vmatpush1.msra.mxu0 0.0
      %599 = vmatprep.subr.mxu0 0.0
      %600 = vmatpush1.msra.mxu0 0.0
      %601 = vmatprep.subr.mxu0 0.0
      %602 = vmatpush1.msra.mxu0 0.0
      %603 = vmatprep.subr.mxu0 0.0
      %604 = vmatpush1.msra.mxu0 0.0
      %605 = vmatprep.subr.mxu0 0.0
      %606 = vmatpush1.msra.mxu0 0.0
      %607 = vmatprep.subr.mxu0 0.0
      %608 = vmatpush1.msra.mxu0 0.0
      %609 = vmatprep.subr.mxu0 0.0
      %610 = vmatpush1.msra.mxu0 0.0
      %611 = vmatprep.subr.mxu0 %v586
      %612 = vmatpush1.msra.mxu0 %v585
      %613 = vmatprep.subr.mxu0 %v584
      %614 = vmatpush1.msra.mxu0 %v583
      %615 = vmatprep.subr.mxu0 %v582
      %616 = vmatpush1.msra.mxu0 %v581
      %617 = vmatprep.subr.mxu0 %v580
      %618 = vmatpush1.msra.mxu0 %v579
      %619 = vmatprep.subr.mxu0 %v578
      %620 = vmatpush1.msra.mxu0 %v577
      %621 = vmatprep.subr.mxu0 %v576
      %622 = vmatpush1.msra.mxu0 %v575
      %623 = vmatprep.subr.mxu0 %v574
      %624 = vmatpush1.msra.mxu0 %v573
      %625 = vmatprep.subr.mxu0 %v572
      %626 = vmatpush1.msra.mxu0 %v571
      %627 = vmatprep.subr.mxu0 %v570
      %628 = vmatpush1.msra.mxu0 %v569
      %629 = vmatprep.subr.mxu0 0.0
      %630 = vmatpush2.msra.mxu0 0.0
      %631 = vmatprep.subr.mxu0 0.0
      %632 = vmatpush2.msra.mxu0 0.0
      %633 = vmatprep.subr.mxu0 0.0
      %634 = vmatpush2.msra.mxu0 0.0
      %635 = vmatprep.subr.mxu0 0.0
      %636 = vmatpush2.msra.mxu0 0.0
      %637 = vmatprep.subr.mxu0 0.0
      %638 = vmatpush2.msra.mxu0 0.0
      %639 = vmatprep.subr.mxu0 0.0
      %640 = vmatpush2.msra.mxu0 0.0
      %641 = vmatprep.subr.mxu0 0.0
      %642 = vmatpush2.msra.mxu0 0.0
      %643 = vmatprep.subr.mxu0 0.0
      %644 = vmatpush2.msra.mxu0 0.0
      %645 = vmatprep.subr.mxu0 0.0
      %646 = vmatpush2.msra.mxu0 0.0
      %647 = vmatprep.subr.mxu0 0.0
      %648 = vmatpush2.msra.mxu0 0.0
      %649 = vmatprep.subr.mxu0 0.0
      %650 = vmatpush2.msra.mxu0 0.0
      %651 = vmatprep.subr.mxu0 0.0
      %652 = vmatpush2.msra.mxu0 0.0
      %653 = vmatprep.subr.mxu0 0.0
      %654 = vmatpush2.msra.mxu0 0.0
      %655 = vmatprep.subr.mxu0 0.0
      %656 = vmatpush2.msra.mxu0 0.0
      %657 = vmatprep.subr.mxu0 0.0
      %658 = vmatpush2.msra.mxu0 0.0
      %659 = vmatprep.subr.mxu0 0.0
      %660 = vmatpush2.msra.mxu0 0.0
      %661 = vmatprep.mubr.f32.mxu0 0.0
      %662 = vmatmul.mubr.f32.gmra.mxu0 %v595
      %v663 = vpop.f32.mrf.mxu0
      %v664 = vadd.f32 %v591, %v663
      %v665 = vpop.f32.mrf.mxu0
      %v666 = vadd.f32 %v591, %v665
      %667 = vdwg.mxu0
      %v668 = vmax.f32 %v664, 0.0
      %v669 = vmax.f32 %v666, 0.0
      %v670 = vmin.f32 %v668, 6.0
      %v671 = vmin.f32 %v669, 6.0
      %672 = vst [vmem:[%s214] sm:$0xff] %v670
      %673 = vst [vmem:[%s214 + $0x8] sm:$0xff] %v671
      %p674 = scmp.lt.s32.totalorder %s15, 1
      %s675 = scalar_select %p674, %s15, 1
      %s676 = smul.addr %s675, 2
      %s677 = smul.addr %s676, 8
      %s678 = scalar_lea.vmem %s4, %s677
      // Predicated region
      $region37: #{conv_ax_upsampler.1} parent=35 // pred_check
        %p679 = pneg %p127
      $region38: #{conv_ax_upsampler.1} parent=35 // pred_check_branch
        %681 = sbr.rel (%p679) target = $region40
      $region39: #{conv_ax_upsampler.1} parent=35 // pred_region
        _
      $region40: #{conv_ax_upsampler.1} parent=35 // pred_fallthru
        _
    $region36: #{conv_ax_upsampler.1} parent=5 // pred_fallthru
      _
    %p682 = scmp.le.s32.totalorder 2, %s10
    // Predicated region
    $region41: #{conv_ax_upsampler.1} parent=5 // pred_check
      %p683 = pneg %p682
    $region42: #{conv_ax_upsampler.1} parent=5 // pred_check_branch
      %685 = sbr.rel (%p683) target = $region44
    $region43: #{conv_ax_upsampler.1} parent=5 // pred_region
      %s686 = ssub.s32 %s10, 2
      // Predicated region
      $region45: #{conv_ax_upsampler.1} parent=43 // pred_check
        %p687 = pneg %p133
      $region46: #{conv_ax_upsampler.1} parent=43 // pred_check_branch
        %689 = sbr.rel (%p687) target = $region48
      $region47: #{conv_ax_upsampler.1} parent=43 // pred_region
        %p690 = scmp.lt.s32.totalorder %s16, 1
        %s691 = scalar_select %p690, %s16, 1
        %s692 = smul.addr %s691, 2
        %s693 = smul.addr %s692, 8
        %s694 = scalar_lea.vmem %s4, %s693
      $region48: #{conv_ax_upsampler.1} parent=43 // pred_fallthru
        _
    $region44: #{conv_ax_upsampler.1} parent=5 // pred_fallthru
      _
  $region6: #{conv_ax_upsampler.1} parent=0 // loop_footer
    %s14 = sadd.s32 1, %s10
  $region7: #{conv_ax_upsampler.1} parent=0 // loop_footer_branch
    %9 = sbr.rel target = $region3
  $region8: #{conv_ax_upsampler.1} parent=0 // loop_exit
    _

</llo_original>
